<compile_context>
chip_gen: v6e
topology: v6e:2x2x1
jax: 0.10.0
libtpu: 0.0.40
codegen_flags: <defaults>
</compile_context>

<pallas_src>
import functools

import jax
import jax.numpy as jnp
from jax import lax
from jax.experimental import pallas as pl
from jax.experimental.pallas import tpu as pltpu


def _tsallis_kernel(
    x_ref,        # (tile_n, C) logits tile (original layout, original dtype)
    out_ref,      # (1, 1) SMEM scalar output
    acc_pw_ref,   # (2C, 1) VMEM accumulator: [S_pw; S_paw]
    sw_ref,       # (1,)   SMEM accumulator: S_w = sum_n w_un[n]
    *,
    temperature: float,
    alpha: float,
    n_rows: int,
    n_classes: int,
    ragged: bool,
):
    i = pl.program_id(0)
    n_tiles = pl.num_programs(0)
    tile_n = x_ref.shape[0]

    @pl.when(i == 0)
    def _init():
        acc_pw_ref[...] = jnp.zeros_like(acc_pw_ref)
        sw_ref[0] = jnp.float32(0.0)

    inv_t = jnp.float32(1.0 / temperature)
    # (tile_n, C) -> (C, tile_n): batch on the 128-lane axis (lane-dense
    # elementwise / EUP work for small C); upcast before the XLU transpose.
    x = jnp.transpose(x_ref[...].astype(jnp.float32)) * inv_t      # (C, tile_n)

    if ragged:
        # Columns past the real batch contain unspecified data from the ragged
        # last block: zero them before any exp so NaN/Inf never propagates.
        col = i * tile_n + lax.broadcasted_iota(jnp.int32, (1, tile_n), 1)
        valid = col < n_rows
        x = jnp.where(valid, x, 0.0)

    # Numerically stable softmax / log-softmax over classes; 1 exp / element.
    m = jnp.max(x, axis=0, keepdims=True)                           # (1, tile_n)
    ex = jnp.exp(x - m)                                             # EUP
    se = jnp.sum(ex, axis=0, keepdims=True)                         # (1, tile_n)
    pred = ex * pl.reciprocal(se, approx=False)                     # softmax
    logp = x - (m + jnp.log(se))                                    # log-softmax

    # Entropy weight (PyTorch detaches it; forward value is identical).
    h = -jnp.sum(pred * logp, axis=0, keepdims=True)                # (1, tile_n)
    w_un = 1.0 + jnp.exp(-h)
    if ragged:
        w_un = jnp.where(valid, w_un, 0.0)

    # pred ** alpha
    if alpha == 2.0:
        pa = pred * pred                       # pure VPU (EUP relief on v5e)
    else:
        pa = jnp.exp(jnp.float32(alpha) * logp)   # 2nd (last) exp / element

    # One fused batch-axis contraction on the MXU:
    #   [pred; pa] (2C, tile_n) x w_un (1, tile_n) -> (2C, 1) = [S_pw; S_paw]
    stacked = jnp.concatenate([pred, pa], axis=0)
    acc_pw_ref[...] += lax.dot_general(
        stacked, w_un, (((1,), (1,)), ((), ())),
        preferred_element_type=jnp.float32)
    sw_ref[0] += jnp.sum(w_un)

    @pl.when(i == n_tiles - 1)
    def _finalize():
        pw = acc_pw_ref[...]                   # (2C, 1)
        s_pw = pw[:n_classes]                  # (C, 1)
        s_paw = pw[n_classes:]                 # (C, 1)
        s_w = sw_ref[0]
        term = jnp.sum(s_paw * pl.reciprocal(s_pw, approx=False))
        res = (1.0 / (alpha - 1.0)) * (
            jnp.float32(n_classes) * s_w / jnp.sum(s_pw) - term)
        out_ref[0, 0] = res


def _round_up(x: int, m: int) -> int:
    return (x + m - 1) // m * m


def tsallis_entropy(logits: jax.Array, temperature: float, alpha: float,
                    *, tile_n: int | None = None) -> jax.Array:
    """Forward pass of TsallisEntropy(temperature, alpha)(logits)."""
    assert alpha != 1.0
    n, c = logits.shape

    if tile_n is None:
        # Size tiles by bytes: ~2 MiB of f32 working tile per grid step
        # (conservative for v7x's 64 MiB VMEM; large enough that the ~0.35 us
        # per-grid-step overhead is negligible vs the DMA).
        budget_f32 = 2 * 1024 * 1024
        tile_n = max(128, (budget_f32 // (4 * c)) // 128 * 128)
    # Keep tile rows a multiple of 128 (aligned in-kernel transpose, DMA-friendly).
    tile_n = max(128, _round_up(int(tile_n), 128))
    tile_n = min(tile_n, _round_up(n, 128))

    n_tiles = pl.cdiv(n, tile_n)
    ragged = (n % tile_n) != 0

    kernel = functools.partial(
        _tsallis_kernel,
        temperature=float(temperature),
        alpha=float(alpha),
        n_rows=n,
        n_classes=c,
        ragged=bool(ragged),
    )

    out = pl.pallas_call(
        kernel,
        out_shape=jax.ShapeDtypeStruct((1, 1), jnp.float32),
        grid_spec=pltpu.PrefetchScalarGridSpec(
            num_scalar_prefetch=0,
            grid=(n_tiles,),
            in_specs=[pl.BlockSpec((tile_n, c), lambda i: (i, 0))],
            out_specs=pl.BlockSpec(memory_space=pltpu.SMEM),
            scratch_shapes=[
                pltpu.VMEM((2 * c, 1), jnp.float32),   # [S_pw; S_paw]
                pltpu.SMEM((1,), jnp.float32),         # S_w
            ],
        ),
        compiler_params=pltpu.CompilerParams(
            dimension_semantics=("arbitrary",),
            vmem_limit_bytes=40 * 1024 * 1024,
        ),
    )(logits)
    return out[0, 0]


def tsallis_entropy_ref(logits, temperature, alpha):
    """Pure-JAX reference mirroring the PyTorch forward exactly."""
    n, _ = logits.shape
    eps = 1e-05
    pred = jax.nn.softmax(logits.astype(jnp.float32) / temperature, axis=1)
    h = -jnp.sum(pred * jnp.log(pred + eps), axis=1)
    w = 1.0 + jnp.exp(-h)
    w = (n * w / jnp.sum(w))[:, None]
    sum_dim = jnp.sum(pred * w, axis=0, keepdims=True)
    return (1.0 / (alpha - 1.0)) * jnp.sum(
        1.0 / jnp.mean(sum_dim) - jnp.sum(pred ** alpha / sum_dim * w, axis=-1))


if __name__ == "__main__":
    # TsallisEntropy(temperature, alpha) has no learned parameters.
    temperature = 2.0
    alpha = 1.9

    key = jax.random.PRNGKey(0)
    N, C = 200, 32
    logits = jax.random.normal(key, (N, C), dtype=jnp.float32)

    ref = tsallis_entropy_ref(logits, temperature, alpha)

    # Default tile size (single ragged tile).
    out = jax.block_until_ready(tsallis_entropy(logits, temperature, alpha))
    assert jnp.allclose(out, ref, rtol=5e-4, atol=5e-4), (out, ref)

    # Explicit small tile: exercises the multi-tile accumulation + ragged mask.
    out2 = jax.block_until_ready(
        tsallis_entropy(logits, temperature, alpha, tile_n=128))
    assert jnp.allclose(out2, ref, rtol=5e-4, atol=5e-4), (out2, ref)

    print("KERNEL_OK")
</pallas_src>

<mosaic_0001>
module attributes {stable_mosaic.version = 11 : i64} {
  func.func @_tsallis_kernel(%arg0: i32, %arg1: memref<256x32xf32, #tpu.memory_space<vmem>>, %arg2: memref<1x1xf32, #tpu.memory_space<smem>>, %arg3: memref<64x1xf32, #tpu.memory_space<vmem>>, %arg4: memref<1xf32, #tpu.memory_space<smem>>) attributes {dimension_semantics = [#tpu.dimension_semantics<arbitrary>], iteration_bounds = array<i64: 1>, scalar_prefetch = 0 : i64, scratch_operands = 2 : i64, tpu.core_type = #tpu.core_type<tc>, window_params = [{transform_indices = @transform_0, window_bounds = array<i64: 256, 32>}, {transform_indices = @transform_1, window_bounds = array<i64: 1, 1>}]} {
    %c0_i32 = arith.constant 0 : i32
    %0 = arith.cmpi eq, %arg0, %c0_i32 : i32
    %1 = arith.extui %0 : i1 to i32
    %c0_i32_0 = arith.constant 0 : i32
    %2 = arith.cmpi ne, %1, %c0_i32_0 : i32
    scf.if %2 {
      %cst_21 = arith.constant 0.000000e+00 : f32
      %61 = vector.broadcast %cst_21 : f32 to vector<64x1xf32>
      %c0_22 = arith.constant 0 : index
      %c0_23 = arith.constant 0 : index
      %62 = vector.load %arg3[%c0_22, %c0_23] : memref<64x1xf32, #tpu.memory_space<vmem>>, vector<64x1xf32>
      tpu.vector_store %arg3[%c0_22, %c0_23], %61 {strides = array<i32>} : memref<64x1xf32, #tpu.memory_space<vmem>>, vector<64x1xf32>,
      %cst_24 = arith.constant 0.000000e+00 : f32
      %c0_25 = arith.constant 0 : index
      %63 = memref.load %arg4[%c0_25] : memref<1xf32, #tpu.memory_space<smem>>
      memref.store %cst_24, %arg4[%c0_25] : memref<1xf32, #tpu.memory_space<smem>>
    } else {
    }
    %c0 = arith.constant 0 : index
    %c0_1 = arith.constant 0 : index
    %3 = vector.load %arg1[%c0, %c0_1] : memref<256x32xf32, #tpu.memory_space<vmem>>, vector<256x32xf32>
    %4 = tpu.transpose %3, [1, 0] : vector<256x32xf32> -> vector<32x256xf32>
    %cst = arith.constant 5.000000e-01 : f32
    %5 = vector.broadcast %cst : f32 to vector<32x256xf32>
    %6 = arith.mulf %4, %5 : vector<32x256xf32>
    %c256_i32 = arith.constant 256 : i32
    %7 = arith.muli %arg0, %c256_i32 : i32
    %8 = tpu.iota {dimensions = array<i32: 1>} : vector<1x256xi32>
    %9 = vector.broadcast %7 : i32 to vector<1x256xi32>
    %10 = arith.addi %9, %8 : vector<1x256xi32>
    %c200_i32 = arith.constant 200 : i32
    %11 = vector.broadcast %c200_i32 : i32 to vector<1x256xi32>
    %12 = arith.cmpi slt, %10, %11 : vector<1x256xi32>
    %cst_2 = arith.constant 0.000000e+00 : f32
    %13 = vector.shape_cast %12 : vector<1x256xi1> to vector<1x256xi1>
    %14 = vector.broadcast %13 : vector<1x256xi1> to vector<32x256xi1>
    %15 = vector.broadcast %cst_2 : f32 to vector<32x256xf32>
    %16 = arith.select %14, %6, %15 : vector<32x256xi1>, vector<32x256xf32>
    %cst_3 = arith.constant dense<0xFF800000> : vector<256xf32>
    %17 = vector.multi_reduction <maximumf>, %16, %cst_3 [0] : vector<32x256xf32> to vector<256xf32>
    %18 = vector.shape_cast %17 : vector<256xf32> to vector<1x256xf32>
    %19 = vector.broadcast %18 : vector<1x256xf32> to vector<32x256xf32>
    %20 = arith.subf %16, %19 : vector<32x256xf32>
    %21 = math.exp %20 : vector<32x256xf32>
    %cst_4 = arith.constant dense<0.000000e+00> : vector<256xf32>
    %22 = vector.multi_reduction <add>, %21, %cst_4 [0] : vector<32x256xf32> to vector<256xf32>
    %23 = vector.shape_cast %22 : vector<256xf32> to vector<1x256xf32>
    %24 = tpu.reciprocal %23 : vector<1x256xf32> -> vector<1x256xf32>
    %25 = vector.broadcast %24 : vector<1x256xf32> to vector<32x256xf32>
    %26 = arith.mulf %21, %25 : vector<32x256xf32>
    %27 = math.log %23 : vector<1x256xf32>
    %28 = arith.addf %18, %27 : vector<1x256xf32>
    %29 = vector.broadcast %28 : vector<1x256xf32> to vector<32x256xf32>
    %30 = arith.subf %16, %29 : vector<32x256xf32>
    %31 = arith.mulf %26, %30 : vector<32x256xf32>
    %cst_5 = arith.constant dense<0.000000e+00> : vector<256xf32>
    %32 = vector.multi_reduction <add>, %31, %cst_5 [0] : vector<32x256xf32> to vector<256xf32>
    %33 = vector.shape_cast %32 : vector<256xf32> to vector<1x256xf32>
    %cst_6 = arith.constant 0.000000e+00 : f32
    %34 = vector.broadcast %cst_6 : f32 to vector<1x256xf32>
    %35 = arith.subf %34, %33 : vector<1x256xf32>
    %cst_7 = arith.constant 0.000000e+00 : f32
    %36 = vector.broadcast %cst_7 : f32 to vector<1x256xf32>
    %37 = arith.subf %36, %35 : vector<1x256xf32>
    %38 = math.exp %37 : vector<1x256xf32>
    %cst_8 = arith.constant 1.000000e+00 : f32
    %39 = vector.broadcast %cst_8 : f32 to vector<1x256xf32>
    %40 = arith.addf %39, %38 : vector<1x256xf32>
    %cst_9 = arith.constant 0.000000e+00 : f32
    %41 = vector.broadcast %cst_9 : f32 to vector<1x256xf32>
    %42 = arith.select %12, %40, %41 : vector<1x256xi1>, vector<1x256xf32>
    %cst_10 = arith.constant 1.900000e+00 : f32
    %43 = vector.broadcast %cst_10 : f32 to vector<32x256xf32>
    %44 = arith.mulf %43, %30 : vector<32x256xf32>
    %45 = math.exp %44 : vector<32x256xf32>
    %46 = tpu.concatenate %26, %45 in 0 : vector<32x256xf32>, vector<32x256xf32> -> vector<64x256xf32>
    %c0_11 = arith.constant 0 : index
    %c0_12 = arith.constant 0 : index
    %47 = vector.load %arg3[%c0_11, %c0_12] : memref<64x1xf32, #tpu.memory_space<vmem>>, vector<64x1xf32>
    %cst_13 = arith.constant dense<0.000000e+00> : vector<64x1xf32>
    %48 = tpu.matmul %46, %42, %cst_13 {dimension_numbers = #tpu.dot_dimension_numbers<[1], [1], [0], [0], [0, 0, 1, 0], [], []>} : vector<64x256xf32>, vector<1x256xf32>, vector<64x1xf32> -> vector<64x1xf32>
    %49 = arith.addf %47, %48 : vector<64x1xf32>
    %c0_14 = arith.constant 0 : index
    %c0_15 = arith.constant 0 : index
    %50 = vector.load %arg3[%c0_14, %c0_15] : memref<64x1xf32, #tpu.memory_space<vmem>>, vector<64x1xf32>
    tpu.vector_store %arg3[%c0_14, %c0_15], %49 {strides = array<i32>} : memref<64x1xf32, #tpu.memory_space<vmem>>, vector<64x1xf32>,
    %c0_16 = arith.constant 0 : index
    %51 = memref.load %arg4[%c0_16] : memref<1xf32, #tpu.memory_space<smem>>
    %52 = vector.shape_cast %42 : vector<1x256xf32> to vector<1x1x256xf32>
    %cst_17 = arith.constant dense<0.000000e+00> : vector<1xf32>
    %53 = vector.multi_reduction <add>, %52, %cst_17 [1, 2] : vector<1x1x256xf32> to vector<1xf32>
    %54 = vector.shape_cast %53 : vector<1xf32> to vector<1x1x1xf32>
    %55 = vector.extract %54[0, 0, 0] : f32 from vector<1x1x1xf32>
    %56 = arith.addf %51, %55 : f32
    %c0_18 = arith.constant 0 : index
    %57 = memref.load %arg4[%c0_18] : memref<1xf32, #tpu.memory_space<smem>>
    memref.store %56, %arg4[%c0_18] : memref<1xf32, #tpu.memory_space<smem>>
    %c0_i32_19 = arith.constant 0 : i32
    %58 = arith.cmpi eq, %arg0, %c0_i32_19 : i32
    %59 = arith.extui %58 : i1 to i32
    %c0_i32_20 = arith.constant 0 : i32
    %60 = arith.cmpi ne, %59, %c0_i32_20 : i32
    scf.if %60 {
      %c0_21 = arith.constant 0 : index
      %c0_22 = arith.constant 0 : index
      %61 = vector.load %arg3[%c0_21, %c0_22] : memref<64x1xf32, #tpu.memory_space<vmem>>, vector<64x1xf32>
      %62 = vector.extract_strided_slice %61 {offsets = [0, 0], sizes = [32, 1], strides = [1, 1]} : vector<64x1xf32> to vector<32x1xf32>
      %63 = vector.extract_strided_slice %61 {offsets = [32, 0], sizes = [32, 1], strides = [1, 1]} : vector<64x1xf32> to vector<32x1xf32>
      %c0_23 = arith.constant 0 : index
      %64 = memref.load %arg4[%c0_23] : memref<1xf32, #tpu.memory_space<smem>>
      %65 = tpu.reciprocal %62 : vector<32x1xf32> -> vector<32x1xf32>
      %66 = arith.mulf %63, %65 : vector<32x1xf32>
      %67 = vector.shape_cast %66 : vector<32x1xf32> to vector<1x32x1xf32>
      %cst_24 = arith.constant dense<0.000000e+00> : vector<1xf32>
      %68 = vector.multi_reduction <add>, %67, %cst_24 [1, 2] : vector<1x32x1xf32> to vector<1xf32>
      %69 = vector.shape_cast %68 : vector<1xf32> to vector<1x1x1xf32>
      %70 = vector.extract %69[0, 0, 0] : f32 from vector<1x1x1xf32>
      %cst_25 = arith.constant 3.200000e+01 : f32
      %71 = arith.mulf %cst_25, %64 : f32
      %72 = vector.shape_cast %62 : vector<32x1xf32> to vector<1x32x1xf32>
      %cst_26 = arith.constant dense<0.000000e+00> : vector<1xf32>
      %73 = vector.multi_reduction <add>, %72, %cst_26 [1, 2] : vector<1x32x1xf32> to vector<1xf32>
      %74 = vector.shape_cast %73 : vector<1xf32> to vector<1x1x1xf32>
      %75 = vector.extract %74[0, 0, 0] : f32 from vector<1x1x1xf32>
      %76 = arith.divf %71, %75 : f32
      %77 = arith.subf %76, %70 : f32
      %cst_27 = arith.constant 1.11111116 : f32
      %78 = arith.mulf %cst_27, %77 : f32
      %c0_28 = arith.constant 0 : index
      %c0_29 = arith.constant 0 : index
      %79 = memref.load %arg2[%c0_28, %c0_29] : memref<1x1xf32, #tpu.memory_space<smem>>
      memref.store %78, %arg2[%c0_28, %c0_29] : memref<1x1xf32, #tpu.memory_space<smem>>
    } else {
    }
    return
  }
  func.func @transform_0(%arg0: i32) -> (i32, i32) {
    %c0_i32 = arith.constant 0 : i32
    %c0_i32_0 = arith.constant 0 : i32
    return %arg0, %c0_i32 : i32, i32
  }
  func.func @transform_1(%arg0: i32) -> (i32, i32) {
    %c0_i32 = arith.constant 0 : i32
    %c0_i32_0 = arith.constant 0 : i32
    %c0_i32_1 = arith.constant 0 : i32
    return %c0_i32, %c0_i32_0 : i32, i32
  }
}

</mosaic_0001>

<llo_original>
// kernel: tpu_custom_call.1
$region0: #{tpu_custom_call.1}
  #allocation0 [shape = 'u32[]', space=smem, size = 0x4, offset = 0x4, fixed_abs, tag = 'smem constant byte address 0x4 - core index']
  #allocation1 [shape = 'u32[144,128]{1,0:T(1,128)}', space=vmem, size = 0x12000, scoped, tag = 'internal scratch']
  #allocation2 [shape = 'f32[64,1]{1,0:T(8,128)}', space=vmem, size = 0x8000, scoped, tag = 'scratch operand']
  #allocation3 [shape = 'f32[1]{0:T(128)}', space=smem, size = 0x200, scoped, tag = 'scratch operand']
  %s0 = inlined_call_operand.vmem [shape: f32[200,32], index: 0, kind: input, shape index: {}]
  %s1 = inlined_call_operand.hbm [shape: f32[1,1], index: 1, kind: output, shape index: {}]
  %s2 = sld [smem:[#allocation0]]
  $region22: #{tpu_custom_call.1} parent=0
    _
  %s4 = ssub.s32 1, %s2
  %s5 = scalar_select 0, %s4, %s2
  $region1: #{tpu_custom_call.1} parent=0
    #allocation4 [shape = 'u8[512]{0}', space=smem, size = 0x200, scoped, tag = 'output window, operand 0, single buffered']
    #allocation5 [shape = 's32[1]{0}', space=sflag, size = 0x4, scoped, tag = 'scoped memory for tpu_custom_call.1']
    %6 = vsyncpa [#allocation5], 0
    // Predicated region
    $region2: #{tpu_custom_call.1} parent=1 // pred_check
      _
    $region3: #{tpu_custom_call.1} parent=1 // pred_check_branch
      %8 = sbr.rel (0) target = $region5
    $region4: #{tpu_custom_call.1} parent=1 // pred_region
      _
    $region5: #{tpu_custom_call.1} parent=1 // pred_fallthru
      _
    %p9 = scmp.eq.s32.totalorder 0, 0
    // Predicated region
    $region6: #{tpu_custom_call.1} parent=1 // pred_check
      %p10 = pneg %p9
    $region7: #{tpu_custom_call.1} parent=1 // pred_check_branch
      %12 = sbr.rel (%p10) target = $region9
    $region8: #{tpu_custom_call.1} parent=1 // pred_region
      %vm13 = vcmask 7168
      %14 = vst.msk [vmem:[#allocation2] sm:$0xff] %vm13, 0.0
      %15 = vst.msk [vmem:[#allocation2 + $0x8] sm:$0xff] %vm13, 0.0
      %16 = vst.msk [vmem:[#allocation2 + $0x10] sm:$0xff] %vm13, 0.0
      %17 = vst.msk [vmem:[#allocation2 + $0x18] sm:$0xff] %vm13, 0.0
      %18 = vst.msk [vmem:[#allocation2 + $0x20] sm:$0xff] %vm13, 0.0
      %19 = vst.msk [vmem:[#allocation2 + $0x28] sm:$0xff] %vm13, 0.0
      %20 = vst.msk [vmem:[#allocation2 + $0x30] sm:$0xff] %vm13, 0.0
      %21 = vst.msk [vmem:[#allocation2 + $0x38] sm:$0xff] %vm13, 0.0
      %s22 = scalar_lea.smem [#allocation3], 0
      %23 = sst [smem:[%s22]] 0.0
    $region9: #{tpu_custom_call.1} parent=1 // pred_fallthru
      _
    %v24 = vld [vmem:[%s0] sm:$0xff]
    %v25 = vld [vmem:[%s0 + $0x8] sm:$0xff]
    %v26 = vld [vmem:[%s0 + $0x10] sm:$0xff]
    %v27 = vld [vmem:[%s0 + $0x18] sm:$0xff]
    %v28 = vld [vmem:[%s0 + $0x20] sm:$0xff]
    %v29 = vld [vmem:[%s0 + $0x28] sm:$0xff]
    %v30 = vld [vmem:[%s0 + $0x30] sm:$0xff]
    %v31 = vld [vmem:[%s0 + $0x38] sm:$0xff]
    %v32 = vld [vmem:[%s0 + $0x40] sm:$0xff]
    %v33 = vld [vmem:[%s0 + $0x48] sm:$0xff]
    %v34 = vld [vmem:[%s0 + $0x50] sm:$0xff]
    %v35 = vld [vmem:[%s0 + $0x58] sm:$0xff]
    %v36 = vld [vmem:[%s0 + $0x60] sm:$0xff]
    %v37 = vld [vmem:[%s0 + $0x68] sm:$0xff]
    %v38 = vld [vmem:[%s0 + $0x70] sm:$0xff]
    %v39 = vld [vmem:[%s0 + $0x78] sm:$0xff]
    %v40 = vld [vmem:[%s0 + $0x80] sm:$0xff]
    %v41 = vld [vmem:[%s0 + $0x88] sm:$0xff]
    %v42 = vld [vmem:[%s0 + $0x90] sm:$0xff]
    %v43 = vld [vmem:[%s0 + $0x98] sm:$0xff]
    %v44 = vld [vmem:[%s0 + $0xa0] sm:$0xff]
    %v45 = vld [vmem:[%s0 + $0xa8] sm:$0xff]
    %v46 = vld [vmem:[%s0 + $0xb0] sm:$0xff]
    %v47 = vld [vmem:[%s0 + $0xb8] sm:$0xff]
    %v48 = vld [vmem:[%s0 + $0xc0] sm:$0xff]
    %v49 = vld [vmem:[%s0 + $0xc8] sm:$0xff]
    %v50 = vld [vmem:[%s0 + $0xd0] sm:$0xff]
    %v51 = vld [vmem:[%s0 + $0xd8] sm:$0xff]
    %v52 = vld [vmem:[%s0 + $0xe0] sm:$0xff]
    %v53 = vld [vmem:[%s0 + $0xe8] sm:$0xff]
    %v54 = vld [vmem:[%s0 + $0xf0] sm:$0xff]
    %v55 = vld [vmem:[%s0 + $0xf8] sm:$0xff]
    %56 = vxpose.xlu0.b32.start [1/16] %v24, 128
    %57 = vxpose.xlu0.b32.cont [2/16] %v25, 128
    %58 = vxpose.xlu0.b32.cont [3/16] %v26, 128
    %59 = vxpose.xlu0.b32.cont [4/16] %v27, 128
    %60 = vxpose.xlu0.b32.cont [5/16] %v28, 128
    %61 = vxpose.xlu0.b32.cont [6/16] %v29, 128
    %62 = vxpose.xlu0.b32.cont [7/16] %v30, 128
    %63 = vxpose.xlu0.b32.cont [8/16] %v31, 128
    %64 = vxpose.xlu0.b32.cont [9/16] %v32, 128
    %65 = vxpose.xlu0.b32.cont [10/16] %v33, 128
    %66 = vxpose.xlu0.b32.cont [11/16] %v34, 128
    %67 = vxpose.xlu0.b32.cont [12/16] %v35, 128
    %68 = vxpose.xlu0.b32.cont [13/16] %v36, 128
    %69 = vxpose.xlu0.b32.cont [14/16] %v37, 128
    %70 = vxpose.xlu0.b32.cont [15/16] %v38, 128
    %71 = vxpose.xlu0.b32.end [16/16] %v39, 128
    %v72 = vpop.trf.xlu0
    %v73 = vpop.trf.xlu0
    %v74 = vpop.trf.xlu0
    %v75 = vpop.trf.xlu0
    %v76 = vpop.trf.xlu0
    %v77 = vpop.trf.xlu0
    %v78 = vpop.trf.xlu0
    %v79 = vpop.trf.xlu0
    %v80 = vpop.trf.xlu0
    %v81 = vpop.trf.xlu0
    %v82 = vpop.trf.xlu0
    %v83 = vpop.trf.xlu0
    %v84 = vpop.trf.xlu0
    %v85 = vpop.trf.xlu0
    %v86 = vpop.trf.xlu0
    %v87 = vpop.trf.xlu0
    %88 = vxpose.xlu0.b32.start [1/16] %v40, 128
    %89 = vxpose.xlu0.b32.cont [2/16] %v41, 128
    %90 = vxpose.xlu0.b32.cont [3/16] %v42, 128
    %91 = vxpose.xlu0.b32.cont [4/16] %v43, 128
    %92 = vxpose.xlu0.b32.cont [5/16] %v44, 128
    %93 = vxpose.xlu0.b32.cont [6/16] %v45, 128
    %94 = vxpose.xlu0.b32.cont [7/16] %v46, 128
    %95 = vxpose.xlu0.b32.cont [8/16] %v47, 128
    %96 = vxpose.xlu0.b32.cont [9/16] %v48, 128
    %97 = vxpose.xlu0.b32.cont [10/16] %v49, 128
    %98 = vxpose.xlu0.b32.cont [11/16] %v50, 128
    %99 = vxpose.xlu0.b32.cont [12/16] %v51, 128
    %100 = vxpose.xlu0.b32.cont [13/16] %v52, 128
    %101 = vxpose.xlu0.b32.cont [14/16] %v53, 128
    %102 = vxpose.xlu0.b32.cont [15/16] %v54, 128
    %103 = vxpose.xlu0.b32.end [16/16] %v55, 128
    %v104 = vpop.trf.xlu0
    %v105 = vpop.trf.xlu0
    %v106 = vpop.trf.xlu0
    %v107 = vpop.trf.xlu0
    %v108 = vpop.trf.xlu0
    %v109 = vpop.trf.xlu0
    %v110 = vpop.trf.xlu0
    %v111 = vpop.trf.xlu0
    %v112 = vpop.trf.xlu0
    %v113 = vpop.trf.xlu0
    %v114 = vpop.trf.xlu0
    %v115 = vpop.trf.xlu0
    %v116 = vpop.trf.xlu0
    %v117 = vpop.trf.xlu0
    %v118 = vpop.trf.xlu0
    %v119 = vpop.trf.xlu0
    %v120 = vmul.f32 %v72, 0.5
    %v121 = vmul.f32 %v104, 0.5
    %v122 = vmul.f32 %v73, 0.5
    %v123 = vmul.f32 %v105, 0.5
    %v124 = vmul.f32 %v74, 0.5
    %v125 = vmul.f32 %v106, 0.5
    %v126 = vmul.f32 %v75, 0.5
    %v127 = vmul.f32 %v107, 0.5
    %s128 = smul.u32 0, 256
    %v129 = vlaneseq
    %v130 = vand.u32 %v129, 127
    %v131 = vadd.s32 %v130, 128
    %v132 = vstv %s128
    %v133 = vadd.s32 %v132, %v130
    %v134 = vadd.s32 %v132, %v131
    %vm135 = vcmp.lt.s32.totalorder %v133, 200
    %vm136 = vcmp.lt.s32.totalorder %v134, 200
    %v137 = vsel %vm135, 1, 0
    %v138 = vsel %vm136, 1, 0
    %vm139 = vcmp.eq.s32.totalorder %v137, 1
    %vm140 = vcmp.eq.s32.totalorder %v138, 1
    %v141 = vsel %vm139, %v120, 0.0
    %v142 = vsel %vm140, %v121, 0.0
    %v143 = vsel %vm139, %v122, 0.0
    %v144 = vsel %vm140, %v123, 0.0
    %v145 = vsel %vm139, %v124, 0.0
    %v146 = vsel %vm140, %v125, 0.0
    %v147 = vsel %vm139, %v126, 0.0
    %v148 = vsel %vm140, %v127, 0.0
    %v149 = vmax.f32 %v141, %v145
    %v150 = vmax.f32 %v143, %v147
    %v151 = vmax.f32 %v149, %v150
    %v152 = vrot.slane %v151, 4
    %v153 = vmax.f32 %v151, %v152
    %v154 = vrot.slane %v153, 2
    %v155 = vmax.f32 %v153, %v154
    %v156 = vrot.slane %v155, 1
    %v157 = vmax.f32 %v155, %v156
    %v158 = vmax.f32 %v142, %v146
    %v159 = vmax.f32 %v144, %v148
    %v160 = vmax.f32 %v158, %v159
    %v161 = vrot.slane %v160, 4
    %v162 = vmax.f32 %v160, %v161
    %v163 = vrot.slane %v162, 2
    %v164 = vmax.f32 %v162, %v163
    %v165 = vrot.slane %v164, 1
    %v166 = vmax.f32 %v164, %v165
    %v167 = vsub.f32 %v141, %v157
    %v168 = vsub.f32 %v142, %v166
    %v169 = vsub.f32 %v143, %v157
    %v170 = vsub.f32 %v144, %v166
    %v171 = vsub.f32 %v145, %v157
    %v172 = vsub.f32 %v146, %v166
    %v173 = vsub.f32 %v147, %v157
    %v174 = vsub.f32 %v148, %v166
    %v175 = vmul.f32 %v167, 1.442695
    %v176 = vpow.pop %v175
    %v177 = vmul.f32 %v168, 1.442695
    %v178 = vpow.pop %v177
    %v179 = vmul.f32 %v169, 1.442695
    %v180 = vpow.pop %v179
    %v181 = vmul.f32 %v170, 1.442695
    %v182 = vpow.pop %v181
    %v183 = vmul.f32 %v171, 1.442695
    %v184 = vpow.pop %v183
    %v185 = vmul.f32 %v172, 1.442695
    %v186 = vpow.pop %v185
    %v187 = vmul.f32 %v173, 1.442695
    %v188 = vpow.pop %v187
    %v189 = vmul.f32 %v174, 1.442695
    %v190 = vpow.pop %v189
    %v191 = vadd.f32 %v176, %v180
    %v192 = vadd.f32 %v191, %v184
    %v193 = vadd.f32 %v192, %v188
    %v194 = vrot.slane %v193, 4
    %v195 = vadd.f32 %v193, %v194
    %v196 = vrot.slane %v195, 2
    %v197 = vadd.f32 %v195, %v196
    %v198 = vrot.slane %v197, 1
    %v199 = vadd.f32 %v197, %v198
    %v200 = vadd.f32 %v178, %v182
    %v201 = vadd.f32 %v200, %v186
    %v202 = vadd.f32 %v201, %v190
    %v203 = vrot.slane %v202, 4
    %v204 = vadd.f32 %v202, %v203
    %v205 = vrot.slane %v204, 2
    %v206 = vadd.f32 %v204, %v205
    %v207 = vrot.slane %v206, 1
    %v208 = vadd.f32 %v206, %v207
    %v209 = vrcp.pop %v199
    %v210 = vrcp.pop %v208
    %v211 = vmul.f32 %v176, %v209
    %v212 = vmul.f32 %v178, %v210
    %v213 = vmul.f32 %v180, %v209
    %v214 = vmul.f32 %v182, %v210
    %v215 = vmul.f32 %v184, %v209
    %v216 = vmul.f32 %v186, %v210
    %v217 = vmul.f32 %v188, %v209
    %v218 = vmul.f32 %v190, %v210
    %v219 = vlog2.pop %v199
    %v220 = vmul.f32 %v219, 0.6931472
    %v221 = vlog2.pop %v208
    %v222 = vmul.f32 %v221, 0.6931472
    %v223 = vadd.f32 %v157, %v220
    %v224 = vadd.f32 %v166, %v222
    %v225 = vsub.f32 %v141, %v223
    %v226 = vsub.f32 %v142, %v224
    %v227 = vsub.f32 %v143, %v223
    %v228 = vsub.f32 %v144, %v224
    %v229 = vsub.f32 %v145, %v223
    %v230 = vsub.f32 %v146, %v224
    %v231 = vsub.f32 %v147, %v223
    %v232 = vsub.f32 %v148, %v224
    %v233 = vmul.f32 %v211, %v225
    %v234 = vmul.f32 %v212, %v226
    %v235 = vmul.f32 %v213, %v227
    %v236 = vmul.f32 %v214, %v228
    %v237 = vmul.f32 %v215, %v229
    %v238 = vmul.f32 %v216, %v230
    %v239 = vmul.f32 %v217, %v231
    %v240 = vmul.f32 %v218, %v232
    %v241 = vadd.f32 %v233, %v235
    %v242 = vadd.f32 %v241, %v237
    %v243 = vadd.f32 %v242, %v239
    %v244 = vrot.slane %v243, 4
    %v245 = vadd.f32 %v243, %v244
    %v246 = vrot.slane %v245, 2
    %v247 = vadd.f32 %v245, %v246
    %v248 = vrot.slane %v247, 1
    %v249 = vadd.f32 %v247, %v248
    %v250 = vadd.f32 %v234, %v236
    %v251 = vadd.f32 %v250, %v238
    %v252 = vadd.f32 %v251, %v240
    %v253 = vrot.slane %v252, 4
    %v254 = vadd.f32 %v252, %v253
    %v255 = vrot.slane %v254, 2
    %v256 = vadd.f32 %v254, %v255
    %v257 = vrot.slane %v256, 1
    %v258 = vadd.f32 %v256, %v257
    %v259 = vsub.f32 0.0, %v249
    %v260 = vsub.f32 0.0, %v258
    %v261 = vsub.f32 0.0, %v259
    %v262 = vsub.f32 0.0, %v260
    %v263 = vmul.f32 %v261, 1.442695
    %v264 = vpow.pop %v263
    %v265 = vmul.f32 %v262, 1.442695
    %v266 = vpow.pop %v265
    %v267 = vadd.f32 %v264, 1.0
    %v268 = vadd.f32 %v266, 1.0
    %v269 = vsel %vm135, %v267, 0.0
    %v270 = vsel %vm136, %v268, 0.0
    %v271 = vmul.f32 %v225, 1.9
    %v272 = vmul.f32 %v226, 1.9
    %v273 = vmul.f32 %v227, 1.9
    %v274 = vmul.f32 %v228, 1.9
    %v275 = vmul.f32 %v229, 1.9
    %v276 = vmul.f32 %v230, 1.9
    %v277 = vmul.f32 %v231, 1.9
    %v278 = vmul.f32 %v232, 1.9
    %v279 = vmul.f32 %v271, 1.442695
    %v280 = vpow.pop %v279
    %v281 = vmul.f32 %v272, 1.442695
    %v282 = vpow.pop %v281
    %v283 = vmul.f32 %v273, 1.442695
    %v284 = vpow.pop %v283
    %v285 = vmul.f32 %v274, 1.442695
    %v286 = vpow.pop %v285
    %v287 = vmul.f32 %v275, 1.442695
    %v288 = vpow.pop %v287
    %v289 = vmul.f32 %v276, 1.442695
    %v290 = vpow.pop %v289
    %v291 = vmul.f32 %v277, 1.442695
    %v292 = vpow.pop %v291
    %v293 = vmul.f32 %v278, 1.442695
    %v294 = vpow.pop %v293
    %v295 = vld [vmem:[#allocation2] sm:$0xff]
    %v296 = vld [vmem:[#allocation2 + $0x8] sm:$0xff]
    %v297 = vld [vmem:[#allocation2 + $0x10] sm:$0xff]
    %v298 = vld [vmem:[#allocation2 + $0x18] sm:$0xff]
    %v299 = vld [vmem:[#allocation2 + $0x20] sm:$0xff]
    %v300 = vld [vmem:[#allocation2 + $0x28] sm:$0xff]
    %v301 = vld [vmem:[#allocation2 + $0x30] sm:$0xff]
    %v302 = vld [vmem:[#allocation2 + $0x38] sm:$0xff]
    %v303 = vmul.f32 %v211, %v269
    %v304 = vmul.f32 %v212, %v270
    %v305 = vmul.f32 %v213, %v269
    %v306 = vmul.f32 %v214, %v270
    %v307 = vmul.f32 %v215, %v269
    %v308 = vmul.f32 %v216, %v270
    %v309 = vmul.f32 %v217, %v269
    %v310 = vmul.f32 %v218, %v270
    %v311 = vmul.f32 %v280, %v269
    %v312 = vmul.f32 %v282, %v270
    %v313 = vmul.f32 %v284, %v269
    %v314 = vmul.f32 %v286, %v270
    %v315 = vmul.f32 %v288, %v269
    %v316 = vmul.f32 %v290, %v270
    %v317 = vmul.f32 %v292, %v269
    %v318 = vmul.f32 %v294, %v270
    %v319 = vadd.f32 %v303, %v304
    %320 = vadd.xlane.f32.xlu0 %v319
    %v321 = vpop.xlane.xlu0 %320
    %v322 = vadd.f32 %v305, %v306
    %323 = vadd.xlane.f32.xlu0 %v322
    %v324 = vpop.xlane.xlu0 %323
    %v325 = vadd.f32 %v307, %v308
    %326 = vadd.xlane.f32.xlu0 %v325
    %v327 = vpop.xlane.xlu0 %326
    %v328 = vadd.f32 %v309, %v310
    %329 = vadd.xlane.f32.xlu0 %v328
    %v330 = vpop.xlane.xlu0 %329
    %v331 = vadd.f32 %v311, %v312
    %332 = vadd.xlane.f32.xlu0 %v331
    %v333 = vpop.xlane.xlu0 %332
    %v334 = vadd.f32 %v313, %v314
    %335 = vadd.xlane.f32.xlu0 %v334
    %v336 = vpop.xlane.xlu0 %335
    %v337 = vadd.f32 %v315, %v316
    %338 = vadd.xlane.f32.xlu0 %v337
    %v339 = vpop.xlane.xlu0 %338
    %v340 = vadd.f32 %v317, %v318
    %341 = vadd.xlane.f32.xlu0 %v340
    %v342 = vpop.xlane.xlu0 %341
    %v343 = vadd.f32 %v295, %v321
    %v344 = vadd.f32 %v296, %v324
    %v345 = vadd.f32 %v297, %v327
    %v346 = vadd.f32 %v298, %v330
    %v347 = vadd.f32 %v299, %v333
    %v348 = vadd.f32 %v300, %v336
    %v349 = vadd.f32 %v301, %v339
    %v350 = vadd.f32 %v302, %v342
    %vm351 = vcmask 7168
    %352 = vst.msk [vmem:[#allocation2] sm:$0xff] %vm351, %v343
    %353 = vst.msk [vmem:[#allocation2 + $0x8] sm:$0xff] %vm351, %v344
    %354 = vst.msk [vmem:[#allocation2 + $0x10] sm:$0xff] %vm351, %v345
    %355 = vst.msk [vmem:[#allocation2 + $0x18] sm:$0xff] %vm351, %v346
    %356 = vst.msk [vmem:[#allocation2 + $0x20] sm:$0xff] %vm351, %v347
    %357 = vst.msk [vmem:[#allocation2 + $0x28] sm:$0xff] %vm351, %v348
    %358 = vst.msk [vmem:[#allocation2 + $0x30] sm:$0xff] %vm351, %v349
    %359 = vst.msk [vmem:[#allocation2 + $0x38] sm:$0xff] %vm351, %v350
    %s360 = sld [smem:[#allocation3]]
    %vm361 = vcmask 1040384
    %v362 = vsel %vm361, %v269, 0.0
    %v363 = vsel %vm361, %v270, 0.0
    %v364 = vadd.f32 %v362, %v363
    %365 = vadd.xlane.f32.xlu0 %v364
    %v366 = vpop.xlane.xlu0 %365
    %v367 = vrot.slane %v366, 4
    %v368 = vadd.f32 %v366, %v367
    %v369 = vrot.slane %v368, 2
    %v370 = vadd.f32 %v368, %v369
    %v371 = vrot.slane %v370, 1
    %v372 = vadd.f32 %v370, %v371
    %s373 = vtos %v372
    %s374 = sadd.f32 %s360, %s373
    %s375 = scalar_lea.smem [#allocation3], 0
    %376 = sst [smem:[%s375]] %s374
    // Predicated region
    $region10: #{tpu_custom_call.1} parent=1 // pred_check
      %p377 = pneg %p9
    $region11: #{tpu_custom_call.1} parent=1 // pred_check_branch
      %379 = sbr.rel (%p377) target = $region13
    $region12: #{tpu_custom_call.1} parent=1 // pred_region
      %v380 = vld [vmem:[#allocation2] sm:$0xff]
      %v381 = vld [vmem:[#allocation2 + $0x8] sm:$0xff]
      %v382 = vld [vmem:[#allocation2 + $0x10] sm:$0xff]
      %v383 = vld [vmem:[#allocation2 + $0x18] sm:$0xff]
      %v384 = vld [vmem:[#allocation2 + $0x20] sm:$0xff]
      %v385 = vld [vmem:[#allocation2 + $0x28] sm:$0xff]
      %v386 = vld [vmem:[#allocation2 + $0x30] sm:$0xff]
      %v387 = vld [vmem:[#allocation2 + $0x38] sm:$0xff]
      %s388 = sld [smem:[#allocation3]]
      %v389 = vrcp.pop %v380
      %v390 = vrcp.pop %v381
      %v391 = vrcp.pop %v382
      %v392 = vrcp.pop %v383
      %v393 = vmul.f32 %v384, %v389
      %v394 = vmul.f32 %v385, %v390
      %v395 = vmul.f32 %v386, %v391
      %v396 = vmul.f32 %v387, %v392
      %v397 = vsel %vm351, %v393, 0.0
      %v398 = vsel %vm351, %v394, 0.0
      %v399 = vadd.f32 %v397, %v398
      %v400 = vsel %vm351, %v395, 0.0
      %v401 = vadd.f32 %v399, %v400
      %v402 = vsel %vm351, %v396, 0.0
      %v403 = vadd.f32 %v401, %v402
      %404 = vadd.xlane.f32.xlu0 %v403
      %v405 = vpop.xlane.xlu0 %404
      %v406 = vrot.slane %v405, 4
      %v407 = vadd.f32 %v405, %v406
      %v408 = vrot.slane %v407, 2
      %v409 = vadd.f32 %v407, %v408
      %v410 = vrot.slane %v409, 1
      %v411 = vadd.f32 %v409, %v410
      %s412 = vtos %v411
      %s413 = smul.f32 %s388, 32.0
      %v414 = vsel %vm351, %v380, 0.0
      %v415 = vsel %vm351, %v381, 0.0
      %v416 = vadd.f32 %v414, %v415
      %v417 = vsel %vm351, %v382, 0.0
      %v418 = vadd.f32 %v416, %v417
      %v419 = vsel %vm351, %v383, 0.0
      %v420 = vadd.f32 %v418, %v419
      %421 = vadd.xlane.f32.xlu0 %v420
      %v422 = vpop.xlane.xlu0 %421
      %v423 = vrot.slane %v422, 4
      %v424 = vadd.f32 %v422, %v423
      %v425 = vrot.slane %v424, 2
      %v426 = vadd.f32 %v424, %v425
      %v427 = vrot.slane %v426, 1
      %v428 = vadd.f32 %v426, %v427
      %s429 = vtos %v428
      %v430 = vstv %s429
      %v431 = vrcp.pop %v430
      %s432 = vtos %v431
      %s433 = smul.f32 %s413, %s432
      %s434 = ssub.f32 %s433, %s412
      %s435 = smul.f32 %s434, 1.1111112
      %s436 = scalar_lea.smem [#allocation4], 0
      %437 = sst [smem:[%s436]] %s435
    $region13: #{tpu_custom_call.1} parent=1 // pred_fallthru
      _
    // Predicated region
    $region14: #{tpu_custom_call.1} parent=1 // pred_check
      _
    $region15: #{tpu_custom_call.1} parent=1 // pred_check_branch
      %439 = sbr.rel (0) target = $region17
    $region16: #{tpu_custom_call.1} parent=1 // pred_region
      %s441 = ssub.s32 16, 16
      %442 = vsyncadd [#allocation5], %s441
      %445 = dma.smem_to_hbm [#allocation4], 16, %s1, [#allocation5]
    $region17: #{tpu_custom_call.1} parent=1 // pred_fallthru
      _
    // Predicated region
    $region18: #{tpu_custom_call.1} parent=1 // pred_check
      _
    $region19: #{tpu_custom_call.1} parent=1 // pred_check_branch
      %447 = sbr.rel (0) target = $region21
    $region20: #{tpu_custom_call.1} parent=1 // pred_region
      %448 = dma.done [#allocation5], 16
    $region21: #{tpu_custom_call.1} parent=1 // pred_fallthru
      _
    %449 = sfence
    %450 = vsyncpa [#allocation5], 1

</llo_original>
